<compile_context>
chip_gen: v7x
topology: tpu7x:2x2x1
jax: 0.10.0
libtpu: 0.0.40
codegen_flags: <defaults>
</compile_context>

<pallas_src>
import math

import jax
import jax.numpy as jnp
from jax import lax
from jax.experimental import pallas as pl
from jax.experimental.pallas import tpu as pltpu


def _round_up(a, b):
    return ((a + b - 1) // b) * b


# ---------------------------------------------------------------------------
# Kernel 1: score = tanh( (x @ transform) * diag_M ), row-tiled, lane-dense out
# ---------------------------------------------------------------------------
def _score_kernel_vpu(x_ref, t_ref, dm_ref, o_ref):
    # x_ref: (TM, C)  t_ref: (1, C)  dm_ref: (1, TM)  o_ref: (1, TM)
    x = x_ref[...].astype(jnp.float32)
    t = t_ref[...].astype(jnp.float32)
    xt = jnp.sum(x * t, axis=1, keepdims=True)        # (TM, 1) VPU mul + XLU lane reduce
    xt_row = jnp.transpose(xt)                        # (TM, 1) -> (1, TM): XLU, lane-dense
    o_ref[...] = jnp.tanh(xt_row * dm_ref[...].astype(jnp.float32))


def _score_kernel_mxu(x_ref, t_ref, dm_ref, o_ref):
    # Fallback: same math as a (1,C) x (TM,C)^T contraction -> natively
    # lane-dense (1, TM).  The kernel is memory-bound so MXU use is free.
    x = x_ref[...].astype(jnp.float32)
    t = t_ref[...].astype(jnp.float32)
    xt_row = lax.dot_general(t, x, (((1,), (1,)), ((), ())),
                             preferred_element_type=jnp.float32,
                             precision=lax.Precision.HIGHEST)      # (1, TM)
    o_ref[...] = jnp.tanh(xt_row * dm_ref[...].astype(jnp.float32))


def _score_call(kernel_fn, x, transform, diag_m, tm):
    n, c = x.shape
    if n <= tm:
        tm = n                     # single block == full array dims (small graphs)
    else:
        # 512-row tiles keep double-buffered (TM, C) inputs well under the
        # 32 MiB scoped-VMEM default even on v7x for C up to a few thousand;
        # raise tm (and vmem_limit_bytes) only for very wide C on v5e/v6e.
        assert tm % 128 == 0 and tm % 8 == 0, "tm must be a multiple of 128"
    n_tiles = pl.cdiv(n, tm)
    t2d = transform.reshape(1, c).astype(jnp.float32)
    dm2d = diag_m.reshape(1, n).astype(jnp.float32)
    out = pl.pallas_call(
        kernel_fn,
        out_shape=jax.ShapeDtypeStruct((1, n), jnp.float32),
        grid_spec=pltpu.PrefetchScalarGridSpec(
            num_scalar_prefetch=0,
            grid=(n_tiles,),
            in_specs=[
                pl.BlockSpec((tm, c), lambda i: (i, 0)),    # x rows (pipelined)
                pl.BlockSpec((1, c), lambda i: (0, 0)),     # transform (tiny, reused)
                pl.BlockSpec((1, tm), lambda i: (0, i)),    # diag(M), lane-dense
            ],
            out_specs=pl.BlockSpec((1, tm), lambda i: (0, i)),  # lane-dense score
        ),
        compiler_params=pltpu.CompilerParams(
            dimension_semantics=("parallel",)),             # megacore split on v7x
    )(x, t2d, dm2d)
    return out[0, :]


_SCORE_KERNEL = None   # resolved once: VPU+XLU (preferred) or MXU fallback


def _resolve_score_kernel():
    """Prefer the VPU-mul + XLU-reduce/transpose formulation (keeps the MXU
    slot free, per review); fall back to the dot formulation if this
    toolchain cannot lower the (TM,1)->(1,TM) relayout."""
    global _SCORE_KERNEL
    if _SCORE_KERNEL is not None:
        return _SCORE_KERNEL
    xp = (jnp.arange(16 * 8, dtype=jnp.float32).reshape(16, 8) - 60.0) / 17.0
    tp = jnp.linspace(0.5, 1.5, 8, dtype=jnp.float32)
    dp = jnp.linspace(-1.0, 1.0, 16, dtype=jnp.float32)
    ref = jnp.tanh(jnp.sum(xp * tp[None, :], axis=1) * dp)
    try:
        got = _score_call(_score_kernel_vpu, xp, tp, dp, tm=512)
        if bool(jnp.allclose(got, ref, atol=1e-5, rtol=1e-5)):
            _SCORE_KERNEL = _score_kernel_vpu
            return _SCORE_KERNEL
    except Exception:
        pass
    _SCORE_KERNEL = _score_kernel_mxu
    return _SCORE_KERNEL


def score_pallas(x, transform, diag_m, *, tm=512):
    """score = tanh((x @ transform) * diag_m), row-tiled Pallas kernel."""
    return _score_call(_resolve_score_kernel(), x, transform, diag_m, tm)


# ---------------------------------------------------------------------------
# Kernel 2: gather k selected rows from HBM and scale them
#   x_out[i, :] = x[perm[i], :] * scale[i]        (scale = multiplier * score[perm])
# ---------------------------------------------------------------------------
def _gather_scale_kernel(perm_ref, x_hbm, scale_ref, xo_ref, xbuf, sems):
    # perm_ref : SMEM (k_pad,) int32  (scalar prefetch)
    # x_hbm    : full (N, C) array left in HBM (memory_space=pl.ANY)
    # scale_ref: (R, 1) f32 per-row scale for this step
    # xo_ref   : (R, C) output block;  xbuf: (R, C) VMEM scratch;  sems: (R,) DMA sems
    r_rows = xo_ref.shape[0]
    base = pl.program_id(0) * r_rows
    copies = []
    for r in range(r_rows):                       # R concurrent single-row DMAs
        p = perm_ref[base + r]
        cp = pltpu.make_async_copy(x_hbm.at[p], xbuf.at[r], sems.at[r])
        cp.start()
        copies.append(cp)
    for cp in copies:
        cp.wait()
    xo_ref[...] = (xbuf[...].astype(jnp.float32) * scale_ref[...]).astype(xo_ref.dtype)


def gather_scale_pallas(perm, x, scale, *, rows_per_step=8):
    """x_out[i] = x[perm[i]] * scale[i].  Only the selected rows of x are moved
    HBM->VMEM (the scalar-prefetched perm supplies the row addresses)."""
    n, c = x.shape
    k = int(perm.shape[0])
    r = rows_per_step
    k_pad = _round_up(max(k, 1), r)
    pad = k_pad - k
    perm_p = jnp.pad(perm.astype(jnp.int32), (0, pad))            # pad with row 0 (valid)
    scale_p = jnp.pad(scale.astype(jnp.float32), (0, pad)).reshape(k_pad, 1)

    out = pl.pallas_call(
        _gather_scale_kernel,
        out_shape=jax.ShapeDtypeStruct((k_pad, c), x.dtype),
        grid_spec=pltpu.PrefetchScalarGridSpec(
            num_scalar_prefetch=1,                                # perm -> SMEM
            grid=(k_pad // r,),
            in_specs=[
                pl.BlockSpec(memory_space=pl.ANY),                # x stays in HBM
                pl.BlockSpec((r, 1), lambda i, perm_ref: (i, 0)),  # per-row scale
            ],
            out_specs=pl.BlockSpec((r, c), lambda i, perm_ref: (i, 0)),
            scratch_shapes=[
                pltpu.VMEM((r, c), x.dtype),
                pltpu.SemaphoreType.DMA((r,)),
            ],
        ),
        compiler_params=pltpu.CompilerParams(
            dimension_semantics=("parallel",)),
    )(perm_p, x, scale_p)
    return out[:k]


# ---------------------------------------------------------------------------
# Glue (plain JAX): top-k selection and edge filtering / remapping
# ---------------------------------------------------------------------------
def _topk_single_graph(score, ratio):
    # batch=None path of the PyTorch module: k = ceil(ratio * N), indices of
    # the k largest scores (descending sort).
    n = score.shape[0]
    k = int(math.ceil(ratio * n))
    perm = jnp.argsort(-score)[:k]
    return perm.astype(jnp.int32), k


def _filter_adj(edge_index, edge_weight, perm, num_nodes):
    # Remap endpoints to pooled ids and drop edges touching removed nodes.
    # PyTorch returns a dynamically-sized edge list; here valid edges are
    # compacted to the front and the tail is padded with (-1, -1)/0.0.
    k = perm.shape[0]
    mask = jnp.full((num_nodes,), -1, dtype=jnp.int32)
    mask = mask.at[perm].set(jnp.arange(k, dtype=jnp.int32))
    row = mask[edge_index[0]]
    col = mask[edge_index[1]]
    keep = (row >= 0) & (col >= 0)
    order = jnp.argsort(jnp.logical_not(keep))        # stable: valid edges first
    row, col, keep_s = row[order], col[order], keep[order]
    ew = edge_weight[order]
    row = jnp.where(keep_s, row, -1)
    col = jnp.where(keep_s, col, -1)
    ew = jnp.where(keep_s, ew, 0.0)
    num_valid = jnp.sum(keep.astype(jnp.int32))
    return jnp.stack([row, col], axis=0), ew, num_valid


def pan_xhm_pooling_forward(x, edge_index, M=None, transform=None,
                            edge_weight=None, diag_m=None,
                            ratio=0.5, multiplier=1.0):
    n, _ = x.shape
    if edge_weight is None:
        edge_weight = jnp.ones((edge_index.shape[1],), jnp.float32)
    if diag_m is None:
        # Only diag(M) is used; callers that have it should pass diag_m
        # directly to avoid shipping the dense [N, N] matrix at all.
        diag_m = jnp.diagonal(M)

    score = score_pallas(x, transform, diag_m)                  # Pallas kernel 1
    perm, k = _topk_single_graph(score, ratio)
    score_perm = jnp.take(score, perm)                          # trivial k-gather (XLA)
    scale = score_perm * jnp.float32(multiplier)                # fold multiplier in
    x_out = gather_scale_pallas(perm, x, scale)                 # Pallas kernel 2
    batch_out = jnp.zeros((k,), jnp.int32)                      # batch[perm] (batch==0)
    new_ei, new_ew, num_valid = _filter_adj(edge_index, edge_weight, perm, n)
    return x_out, new_ei, new_ew, batch_out, perm, score_perm, num_valid


# ---------------------------------------------------------------------------
if __name__ == "__main__":
    key = jax.random.PRNGKey(0)

    def run_case(case_id, n, c, e, ratio=0.5, multiplier=1.0):
        k_x, k_m, k_e = jax.random.split(jax.random.fold_in(key, case_id), 3)
        x = jax.random.normal(k_x, (n, c), jnp.float32)
        M = jax.random.normal(k_m, (n, n), jnp.float32)
        edge_index = jax.random.randint(k_e, (2, e), 0, n).astype(jnp.int32)
        transform = jnp.ones((c,), jnp.float32)   # Parameter init: torch.ones(in_channels)

        outs = pan_xhm_pooling_forward(x, edge_index, M, transform,
                                       ratio=ratio, multiplier=multiplier)
        outs = jax.block_until_ready(outs)
        x_out, new_ei, new_ew, batch_out, perm, score_perm, num_valid = outs
        k = x_out.shape[0]

        # Kernel 1 check: Pallas score vs pure-JAX reference (f32 elementwise).
        score_k = score_pallas(x, transform, jnp.diagonal(M))
        score_r = jnp.tanh(jnp.sum(x * transform[None, :], axis=1) * jnp.diagonal(M))
        assert jnp.allclose(score_k, score_r, atol=1e-5, rtol=1e-5), "score kernel mismatch"

        # Kernel 2 check: gather+scale against the returned perm & kernel score.
        x_ref = multiplier * (x[perm] * score_k[perm][:, None])
        assert jnp.allclose(x_out, x_ref, atol=1e-5, rtol=1e-5), "pooled x mismatch"
        assert jnp.allclose(score_perm, score_k[perm], atol=1e-6), "score[perm] mismatch"

        # Glue sanity.
        assert perm.shape == (k,) and batch_out.shape == (k,)
        assert new_ei.shape == (2, e) and new_ew.shape == (e,)
        assert int(num_valid) <= e

    # Small case (single full-dim blocks), matches the module's toy sizes.
    run_case(0, n=16, c=8, e=32, ratio=0.5, multiplier=1.0)
    # Larger case: exercises row tiling with partial blocks (N not a multiple
    # of 512), multi-step gather and perm padding, and the multiplier path.
    run_case(1, n=1030, c=40, e=256, ratio=0.5, multiplier=2.0)

    print("KERNEL_OK")
</pallas_src>

<mosaic_0001>
module attributes {stable_mosaic.version = 11 : i64} {
  func.func @_score_kernel_vpu(%arg0: i32, %arg1: memref<16x8xf32, #tpu.memory_space<vmem>>, %arg2: memref<1x8xf32, #tpu.memory_space<vmem>>, %arg3: memref<1x16xf32, #tpu.memory_space<vmem>>, %arg4: memref<1x16xf32, #tpu.memory_space<vmem>>) attributes {dimension_semantics = [#tpu.dimension_semantics<parallel>], iteration_bounds = array<i64: 1>, scalar_prefetch = 0 : i64, scratch_operands = 0 : i64, tpu.core_type = #tpu.core_type<tc>, window_params = [{transform_indices = @transform_0, window_bounds = array<i64: 16, 8>}, {pipeline_mode = #tpu.pipeline_mode<synchronous>, transform_indices = @transform_1, window_bounds = array<i64: 1, 8>}, {transform_indices = @transform_2, window_bounds = array<i64: 1, 16>}, {transform_indices = @transform_3, window_bounds = array<i64: 1, 16>}]} {
    %c0 = arith.constant 0 : index
    %c0_0 = arith.constant 0 : index
    %0 = vector.load %arg1[%c0, %c0_0] : memref<16x8xf32, #tpu.memory_space<vmem>>, vector<16x8xf32>
    %c0_1 = arith.constant 0 : index
    %c0_2 = arith.constant 0 : index
    %1 = vector.load %arg2[%c0_1, %c0_2] : memref<1x8xf32, #tpu.memory_space<vmem>>, vector<1x8xf32>
    %2 = vector.broadcast %1 : vector<1x8xf32> to vector<16x8xf32>
    %3 = arith.mulf %0, %2 : vector<16x8xf32>
    %cst = arith.constant dense<0.000000e+00> : vector<16xf32>
    %4 = vector.multi_reduction <add>, %3, %cst [1] : vector<16x8xf32> to vector<16xf32>
    %5 = vector.shape_cast %4 : vector<16xf32> to vector<16x1xf32>
    %6 = tpu.transpose %5, [1, 0] : vector<16x1xf32> -> vector<1x16xf32>
    %c0_3 = arith.constant 0 : index
    %c0_4 = arith.constant 0 : index
    %7 = vector.load %arg3[%c0_3, %c0_4] : memref<1x16xf32, #tpu.memory_space<vmem>>, vector<1x16xf32>
    %8 = arith.mulf %6, %7 : vector<1x16xf32>
    %9 = math.tanh %8 : vector<1x16xf32>
    %c0_5 = arith.constant 0 : index
    %c0_6 = arith.constant 0 : index
    %10 = vector.load %arg4[%c0_5, %c0_6] : memref<1x16xf32, #tpu.memory_space<vmem>>, vector<1x16xf32>
    tpu.vector_store %arg4[%c0_5, %c0_6], %9 {strides = array<i32>} : memref<1x16xf32, #tpu.memory_space<vmem>>, vector<1x16xf32>,
    return
  }
  func.func @transform_0(%arg0: i32) -> (i32, i32) {
    %c0_i32 = arith.constant 0 : i32
    %c0_i32_0 = arith.constant 0 : i32
    return %arg0, %c0_i32 : i32, i32
  }
  func.func @transform_1(%arg0: i32) -> (i32, i32) {
    %c0_i32 = arith.constant 0 : i32
    %c0_i32_0 = arith.constant 0 : i32
    %c0_i32_1 = arith.constant 0 : i32
    return %c0_i32, %c0_i32_0 : i32, i32
  }
  func.func @transform_2(%arg0: i32) -> (i32, i32) {
    %c0_i32 = arith.constant 0 : i32
    %c0_i32_0 = arith.constant 0 : i32
    return %c0_i32, %arg0 : i32, i32
  }
  func.func @transform_3(%arg0: i32) -> (i32, i32) {
    %c0_i32 = arith.constant 0 : i32
    %c0_i32_0 = arith.constant 0 : i32
    return %c0_i32, %arg0 : i32, i32
  }
}

module attributes {stable_mosaic.version = 11 : i64} {
  func.func @_score_kernel_mxu(%arg0: i32, %arg1: memref<16x8xf32, #tpu.memory_space<vmem>>, %arg2: memref<1x8xf32, #tpu.memory_space<vmem>>, %arg3: memref<1x16xf32, #tpu.memory_space<vmem>>, %arg4: memref<1x16xf32, #tpu.memory_space<vmem>>) attributes {dimension_semantics = [#tpu.dimension_semantics<parallel>], iteration_bounds = array<i64: 1>, scalar_prefetch = 0 : i64, scratch_operands = 0 : i64, tpu.core_type = #tpu.core_type<tc>, window_params = [{transform_indices = @transform_0, window_bounds = array<i64: 16, 8>}, {pipeline_mode = #tpu.pipeline_mode<synchronous>, transform_indices = @transform_1, window_bounds = array<i64: 1, 8>}, {transform_indices = @transform_2, window_bounds = array<i64: 1, 16>}, {transform_indices = @transform_3, window_bounds = array<i64: 1, 16>}]} {
    %c0 = arith.constant 0 : index
    %c0_0 = arith.constant 0 : index
    %0 = vector.load %arg1[%c0, %c0_0] : memref<16x8xf32, #tpu.memory_space<vmem>>, vector<16x8xf32>
    %c0_1 = arith.constant 0 : index
    %c0_2 = arith.constant 0 : index
    %1 = vector.load %arg2[%c0_1, %c0_2] : memref<1x8xf32, #tpu.memory_space<vmem>>, vector<1x8xf32>
    %cst = arith.constant dense<0.000000e+00> : vector<1x16xf32>
    %2 = tpu.matmul %1, %0, %cst {dimension_numbers = #tpu.dot_dimension_numbers<[1], [1], [0], [0], [0, 0, 1, 0], [], []>, precision = #tpu.contract_precision<fp32>} : vector<1x8xf32>, vector<16x8xf32>, vector<1x16xf32> -> vector<1x16xf32>
    %c0_3 = arith.constant 0 : index
    %c0_4 = arith.constant 0 : index
    %3 = vector.load %arg3[%c0_3, %c0_4] : memref<1x16xf32, #tpu.memory_space<vmem>>, vector<1x16xf32>
    %4 = arith.mulf %2, %3 : vector<1x16xf32>
    %5 = math.tanh %4 : vector<1x16xf32>
    %c0_5 = arith.constant 0 : index
    %c0_6 = arith.constant 0 : index
    %6 = vector.load %arg4[%c0_5, %c0_6] : memref<1x16xf32, #tpu.memory_space<vmem>>, vector<1x16xf32>
    tpu.vector_store %arg4[%c0_5, %c0_6], %5 {strides = array<i32>} : memref<1x16xf32, #tpu.memory_space<vmem>>, vector<1x16xf32>,
    return
  }
  func.func @transform_0(%arg0: i32) -> (i32, i32) {
    %c0_i32 = arith.constant 0 : i32
    %c0_i32_0 = arith.constant 0 : i32
    return %arg0, %c0_i32 : i32, i32
  }
  func.func @transform_1(%arg0: i32) -> (i32, i32) {
    %c0_i32 = arith.constant 0 : i32
    %c0_i32_0 = arith.constant 0 : i32
    %c0_i32_1 = arith.constant 0 : i32
    return %c0_i32, %c0_i32_0 : i32, i32
  }
  func.func @transform_2(%arg0: i32) -> (i32, i32) {
    %c0_i32 = arith.constant 0 : i32
    %c0_i32_0 = arith.constant 0 : i32
    return %c0_i32, %arg0 : i32, i32
  }
  func.func @transform_3(%arg0: i32) -> (i32, i32) {
    %c0_i32 = arith.constant 0 : i32
    %c0_i32_0 = arith.constant 0 : i32
    return %c0_i32, %arg0 : i32, i32
  }
}

</mosaic_0001>

<llo_original>
// kernel: tpu_custom_call.1
$region0: #{tpu_custom_call.1}
  #allocation0 [shape = 'u32[]', space=smem, size = 0x4, offset = 0x4, fixed_abs, tag = 'smem constant byte address 0x4 - core index']
  #allocation1 [shape = 'u32[144,128]{1,0:T(1,128)}', space=vmem, size = 0x12000, scoped, tag = 'internal scratch']
  %s0 = inlined_call_operand.vmem [shape: f32[16,8], index: 0, kind: input, shape index: {}]
  %s1 = inlined_call_operand.vmem [shape: f32[1,8], index: 1, kind: input, shape index: {}]
  %s2 = inlined_call_operand.vmem [shape: f32[1,16], index: 2, kind: input, shape index: {}]
  %s3 = inlined_call_operand.hbm [shape: f32[1,16], index: 3, kind: output, shape index: {}]
  %s4 = sld [smem:[#allocation0]]
  $region22: #{tpu_custom_call.1} parent=0
    _
  %s6 = ssub.s32 1, %s4
  %s7 = scalar_select 0, %s6, %s4
  $region1: #{tpu_custom_call.1} parent=0
    #allocation2 [shape = 'u8[512]{0}', space=vmem, size = 0x400, scoped, tag = 'output window, operand 0, single buffered']
    #allocation3 [shape = 's32[1]{0}', space=sflag, size = 0x4, scoped, tag = 'scoped memory for tpu_custom_call.1']
    %8 = vsyncpa [#allocation3], 0
    // Predicated region
    $region2: #{tpu_custom_call.1} parent=1 // pred_check
      _
    $region3: #{tpu_custom_call.1} parent=1 // pred_check_branch
      %10 = sbr.rel (0) target = $region5
    $region4: #{tpu_custom_call.1} parent=1 // pred_region
      _
    $region5: #{tpu_custom_call.1} parent=1 // pred_fallthru
      _
    // Predicated region
    $region6: #{tpu_custom_call.1} parent=1 // pred_check
      _
    $region7: #{tpu_custom_call.1} parent=1 // pred_check_branch
      %12 = sbr.rel (0) target = $region9
    $region8: #{tpu_custom_call.1} parent=1 // pred_region
      _
    $region9: #{tpu_custom_call.1} parent=1 // pred_fallthru
      _
    // Predicated region
    $region10: #{tpu_custom_call.1} parent=1 // pred_check
      _
    $region11: #{tpu_custom_call.1} parent=1 // pred_check_branch
      %14 = sbr.rel (0) target = $region13
    $region12: #{tpu_custom_call.1} parent=1 // pred_region
      _
    $region13: #{tpu_custom_call.1} parent=1 // pred_fallthru
      _
    %v15 = vld [vmem:[%s0] sm:$0xff]
    %v16 = vld [vmem:[%s0 + $0x8] sm:$0xff]
    %v17 = vld [vmem:[%s1] sm:$0x1]
    %v19 = vlaneseq
    %v20 = vshrl.u32 %v19, 7
    %v21 = vsub.s32 0, %v20
    %v22 = vrot.slane %v17, %v21
    %v24 = vmul.f32 %v15, %v22
    %v25 = vmul.f32 %v16, %v22
    %vm26 = vcmask 64512
    %v27 = vsel %vm26, %v24, 0.0
    %28 = vadd.xlane.f32.xlu0 %v27
    %v29 = vpop.xlane.xlu0 %28
    %v30 = vsel %vm26, %v25, 0.0
    %31 = vadd.xlane.f32.xlu0 %v30
    %v32 = vpop.xlane.xlu0 %31
    %33 = vxpose.xlu0.b32.start [1/16] %v29, 128
    %34 = vxpose.xlu0.b32.cont [2/16] %v32, 128
    %35 = vxpose.xlu0.b32.cont [3/16] 0.0, 128
    %36 = vxpose.xlu0.b32.cont [4/16] 0.0, 128
    %37 = vxpose.xlu0.b32.cont [5/16] 0.0, 128
    %38 = vxpose.xlu0.b32.cont [6/16] 0.0, 128
    %39 = vxpose.xlu0.b32.cont [7/16] 0.0, 128
    %40 = vxpose.xlu0.b32.cont [8/16] 0.0, 128
    %41 = vxpose.xlu0.b32.cont [9/16] 0.0, 128
    %42 = vxpose.xlu0.b32.cont [10/16] 0.0, 128
    %43 = vxpose.xlu0.b32.cont [11/16] 0.0, 128
    %44 = vxpose.xlu0.b32.cont [12/16] 0.0, 128
    %45 = vxpose.xlu0.b32.cont [13/16] 0.0, 128
    %46 = vxpose.xlu0.b32.cont [14/16] 0.0, 128
    %47 = vxpose.xlu0.b32.cont [15/16] 0.0, 128
    %48 = vxpose.xlu0.b32.end [16/16] 0.0, 128
    %v49 = vpop.trf.xlu0
    %v50 = vpop.trf.xlu0
    %v51 = vpop.trf.xlu0
    %v52 = vpop.trf.xlu0
    %v53 = vpop.trf.xlu0
    %v54 = vpop.trf.xlu0
    %v55 = vpop.trf.xlu0
    %v56 = vpop.trf.xlu0
    %v57 = vpop.trf.xlu0
    %v58 = vpop.trf.xlu0
    %v59 = vpop.trf.xlu0
    %v60 = vpop.trf.xlu0
    %v61 = vpop.trf.xlu0
    %v62 = vpop.trf.xlu0
    %v63 = vpop.trf.xlu0
    %v64 = vpop.trf.xlu0
    %v65 = vld [vmem:[%s2] sm:$0x1]
    %v66 = vmul.f32 %v49, %v65
    %v67 = vtanh.pop %v66
    %vm68 = vcmask 122880
    %69 = vst.msk [vmem:[#allocation2] sm:$0x1] %vm68, %v67
    // Predicated region
    $region14: #{tpu_custom_call.1} parent=1 // pred_check
      _
    $region15: #{tpu_custom_call.1} parent=1 // pred_check_branch
      %71 = sbr.rel (0) target = $region17
    $region16: #{tpu_custom_call.1} parent=1 // pred_region
      %s73 = ssub.s32 16, 16
      %74 = vsyncadd [#allocation3], %s73
      %s76 = sshll.u32 [#allocation2], 4
      %s77 = int_to_ptr.vmem [resolvable:$true] %s76
      %79 = dma.vmem_to_hbm [thread:$0]  %s77, 16, %s3, [#allocation3]
    $region17: #{tpu_custom_call.1} parent=1 // pred_fallthru
      _
    // Predicated region
    $region18: #{tpu_custom_call.1} parent=1 // pred_check
      _
    $region19: #{tpu_custom_call.1} parent=1 // pred_check_branch
      %81 = sbr.rel (0) target = $region21
    $region20: #{tpu_custom_call.1} parent=1 // pred_region
      %82 = dma.done [#allocation3], 16
    $region21: #{tpu_custom_call.1} parent=1 // pred_fallthru
      _
    %83 = vsyncpa [#allocation3], 1

// kernel: tpu_custom_call.1
$region0: #{tpu_custom_call.1}
  #allocation0 [shape = 'u32[]', space=smem, size = 0x4, offset = 0x4, fixed_abs, tag = 'smem constant byte address 0x4 - core index']
  #allocation1 [shape = 'u32[144,128]{1,0:T(1,128)}', space=vmem, size = 0x12000, scoped, tag = 'internal scratch']
  %s0 = inlined_call_operand.vmem [shape: f32[16,8], index: 0, kind: input, shape index: {}]
  %s1 = inlined_call_operand.vmem [shape: f32[1,8], index: 1, kind: input, shape index: {}]
  %s2 = inlined_call_operand.vmem [shape: f32[1,16], index: 2, kind: input, shape index: {}]
  %s3 = inlined_call_operand.hbm [shape: f32[1,16], index: 3, kind: output, shape index: {}]
  %s4 = sld [smem:[#allocation0]]
  $region22: #{tpu_custom_call.1} parent=0
    _
  %s6 = ssub.s32 1, %s4
  %s7 = scalar_select 0, %s6, %s4
  $region1: #{tpu_custom_call.1} parent=0
    #allocation2 [shape = 'u8[512]{0}', space=vmem, size = 0x400, scoped, tag = 'output window, operand 0, single buffered']
    #allocation3 [shape = 's32[1]{0}', space=sflag, size = 0x4, scoped, tag = 'scoped memory for tpu_custom_call.1']
    %8 = vsyncpa [#allocation3], 0
    // Predicated region
    $region2: #{tpu_custom_call.1} parent=1 // pred_check
      _
    $region3: #{tpu_custom_call.1} parent=1 // pred_check_branch
      %10 = sbr.rel (0) target = $region5
    $region4: #{tpu_custom_call.1} parent=1 // pred_region
      _
    $region5: #{tpu_custom_call.1} parent=1 // pred_fallthru
      _
    // Predicated region
    $region6: #{tpu_custom_call.1} parent=1 // pred_check
      _
    $region7: #{tpu_custom_call.1} parent=1 // pred_check_branch
      %12 = sbr.rel (0) target = $region9
    $region8: #{tpu_custom_call.1} parent=1 // pred_region
      _
    $region9: #{tpu_custom_call.1} parent=1 // pred_fallthru
      _
    // Predicated region
    $region10: #{tpu_custom_call.1} parent=1 // pred_check
      _
    $region11: #{tpu_custom_call.1} parent=1 // pred_check_branch
      %14 = sbr.rel (0) target = $region13
    $region12: #{tpu_custom_call.1} parent=1 // pred_region
      _
    $region13: #{tpu_custom_call.1} parent=1 // pred_fallthru
      _
    %v15 = vld [vmem:[%s0] sm:$0xff]
    %v16 = vld [vmem:[%s0 + $0x8] sm:$0xff]
    %v17 = vld [vmem:[%s1] sm:$0x1]
    %vm18 = vcmask 64512
    %v20 = vsel %vm18, %v17, 0
    %v23 = vsel %vm18, %v15, 0
    %v26 = vsel %vm18, %v16, 0
    %28 = vmatprep.subr.mxu0 0.0
    %v29 = vand.u32 %v23, 4294901760
    %30 = vmatpush1.xpose.msra.mxu0 %v29
    %31 = vmatprep.subr.mxu0 0.0
    %v32 = vand.u32 %v26, 4294901760
    %33 = vmatpush1.xpose.msra.mxu0 %v32
    %34 = vmatprep.subr.mxu0 0.0
    %35 = vmatpush1.xpose.msra.mxu0 0.0
    %36 = vmatprep.subr.mxu0 0.0
    %37 = vmatpush1.xpose.msra.mxu0 0.0
    %38 = vmatprep.subr.mxu0 0.0
    %39 = vmatpush1.xpose.msra.mxu0 0.0
    %40 = vmatprep.subr.mxu0 0.0
    %41 = vmatpush1.xpose.msra.mxu0 0.0
    %42 = vmatprep.subr.mxu0 0.0
    %43 = vmatpush1.xpose.msra.mxu0 0.0
    %44 = vmatprep.subr.mxu0 0.0
    %45 = vmatpush1.xpose.msra.mxu0 0.0
    %46 = vmatprep.subr.mxu0 0.0
    %47 = vmatpush1.xpose.msra.mxu0 0.0
    %48 = vmatprep.subr.mxu0 0.0
    %49 = vmatpush1.xpose.msra.mxu0 0.0
    %50 = vmatprep.subr.mxu0 0.0
    %51 = vmatpush1.xpose.msra.mxu0 0.0
    %52 = vmatprep.subr.mxu0 0.0
    %53 = vmatpush1.xpose.msra.mxu0 0.0
    %54 = vmatprep.subr.mxu0 0.0
    %55 = vmatpush1.xpose.msra.mxu0 0.0
    %56 = vmatprep.subr.mxu0 0.0
    %57 = vmatpush1.xpose.msra.mxu0 0.0
    %58 = vmatprep.subr.mxu0 0.0
    %59 = vmatpush1.xpose.msra.mxu0 0.0
    %60 = vmatprep.subr.mxu0 0.0
    %61 = vmatpush1.xpose.msra.mxu0 0.0
    %62 = vmatprep.subr.mxu0 0.0
    %63 = vmatpush1.xpose.msra.mxu0 0.0
    %64 = vmatprep.subr.mxu0 0.0
    %65 = vmatpush1.xpose.msra.mxu0 0.0
    %66 = vmatprep.subr.mxu0 0.0
    %67 = vmatpush1.xpose.msra.mxu0 0.0
    %68 = vmatprep.subr.mxu0 0.0
    %69 = vmatpush1.xpose.msra.mxu0 0.0
    %70 = vmatprep.subr.mxu0 0.0
    %71 = vmatpush1.xpose.msra.mxu0 0.0
    %72 = vmatprep.subr.mxu0 0.0
    %73 = vmatpush1.xpose.msra.mxu0 0.0
    %74 = vmatprep.subr.mxu0 0.0
    %75 = vmatpush1.xpose.msra.mxu0 0.0
    %76 = vmatprep.subr.mxu0 0.0
    %77 = vmatpush1.xpose.msra.mxu0 0.0
    %78 = vmatprep.subr.mxu0 0.0
    %79 = vmatpush1.xpose.msra.mxu0 0.0
    %80 = vmatprep.subr.mxu0 0.0
    %81 = vmatpush1.xpose.msra.mxu0 0.0
    %82 = vmatprep.subr.mxu0 0.0
    %83 = vmatpush1.xpose.msra.mxu0 0.0
    %84 = vmatprep.subr.mxu0 0.0
    %85 = vmatpush1.xpose.msra.mxu0 0.0
    %86 = vmatprep.subr.mxu0 0.0
    %87 = vmatpush1.xpose.msra.mxu0 0.0
    %88 = vmatprep.subr.mxu0 0.0
    %89 = vmatpush1.xpose.msra.mxu0 0.0
    %90 = vmatprep.subr.mxu0 0.0
    %91 = vmatpush1.xpose.msra.mxu0 0.0
    %92 = vmatprep.subr.mxu0 0.0
    %93 = vmatpush1.xpose.msra.mxu0 0.0
    %94 = vmatprep.mubr.f32.mxu0 0.0
    %v95 = vand.u32 %v20, 4294901760
    %v96 = vsub.f32 %v20, %v95
    %v97 = vand.u32 %v96, 4294901760
    %v98 = vsub.f32 %v96, %v97
    %v99 = vand.u32 %v98, 4294901760
    %100 = vmatmul.mubr.f32.gmra.mrb[0].mxu0 %v99
    %v101 = vpop.f32.mrb[0].mxu0
    %v102 = vadd.f32 0.0, %v101
    %v103 = vpop.f32.mrb[0].mxu0
    %104 = vdwg.mxu0
    %105 = vmatprep.subr.mxu0 0.0
    %v106 = vand.u32 %v23, 4294901760
    %v107 = vsub.f32 %v23, %v106
    %v108 = vand.u32 %v107, 4294901760
    %v109 = vsub.f32 %v107, %v108
    %v110 = vand.u32 %v109, 4294901760
    %111 = vmatpush1.xpose.msra.mxu0 %v110
    %112 = vmatprep.subr.mxu0 0.0
    %v113 = vand.u32 %v26, 4294901760
    %v114 = vsub.f32 %v26, %v113
    %v115 = vand.u32 %v114, 4294901760
    %v116 = vsub.f32 %v114, %v115
    %v117 = vand.u32 %v116, 4294901760
    %118 = vmatpush1.xpose.msra.mxu0 %v117
    %119 = vmatprep.subr.mxu0 0.0
    %120 = vmatpush1.xpose.msra.mxu0 0.0
    %121 = vmatprep.subr.mxu0 0.0
    %122 = vmatpush1.xpose.msra.mxu0 0.0
    %123 = vmatprep.subr.mxu0 0.0
    %124 = vmatpush1.xpose.msra.mxu0 0.0
    %125 = vmatprep.subr.mxu0 0.0
    %126 = vmatpush1.xpose.msra.mxu0 0.0
    %127 = vmatprep.subr.mxu0 0.0
    %128 = vmatpush1.xpose.msra.mxu0 0.0
    %129 = vmatprep.subr.mxu0 0.0
    %130 = vmatpush1.xpose.msra.mxu0 0.0
    %131 = vmatprep.subr.mxu0 0.0
    %132 = vmatpush1.xpose.msra.mxu0 0.0
    %133 = vmatprep.subr.mxu0 0.0
    %134 = vmatpush1.xpose.msra.mxu0 0.0
    %135 = vmatprep.subr.mxu0 0.0
    %136 = vmatpush1.xpose.msra.mxu0 0.0
    %137 = vmatprep.subr.mxu0 0.0
    %138 = vmatpush1.xpose.msra.mxu0 0.0
    %139 = vmatprep.subr.mxu0 0.0
    %140 = vmatpush1.xpose.msra.mxu0 0.0
    %141 = vmatprep.subr.mxu0 0.0
    %142 = vmatpush1.xpose.msra.mxu0 0.0
    %143 = vmatprep.subr.mxu0 0.0
    %144 = vmatpush1.xpose.msra.mxu0 0.0
    %145 = vmatprep.subr.mxu0 0.0
    %146 = vmatpush1.xpose.msra.mxu0 0.0
    %147 = vmatprep.subr.mxu0 0.0
    %148 = vmatpush1.xpose.msra.mxu0 0.0
    %149 = vmatprep.subr.mxu0 0.0
    %150 = vmatpush1.xpose.msra.mxu0 0.0
    %151 = vmatprep.subr.mxu0 0.0
    %152 = vmatpush1.xpose.msra.mxu0 0.0
    %153 = vmatprep.subr.mxu0 0.0
    %154 = vmatpush1.xpose.msra.mxu0 0.0
    %155 = vmatprep.subr.mxu0 0.0
    %156 = vmatpush1.xpose.msra.mxu0 0.0
    %157 = vmatprep.subr.mxu0 0.0
    %158 = vmatpush1.xpose.msra.mxu0 0.0
    %159 = vmatprep.subr.mxu0 0.0
    %160 = vmatpush1.xpose.msra.mxu0 0.0
    %161 = vmatprep.subr.mxu0 0.0
    %162 = vmatpush1.xpose.msra.mxu0 0.0
    %163 = vmatprep.subr.mxu0 0.0
    %164 = vmatpush1.xpose.msra.mxu0 0.0
    %165 = vmatprep.subr.mxu0 0.0
    %166 = vmatpush1.xpose.msra.mxu0 0.0
    %167 = vmatprep.subr.mxu0 0.0
    %168 = vmatpush1.xpose.msra.mxu0 0.0
    %169 = vmatprep.subr.mxu0 0.0
    %170 = vmatpush1.xpose.msra.mxu0 0.0
    %171 = vmatprep.subr.mxu0 0.0
    %172 = vmatpush1.xpose.msra.mxu0 0.0
    %173 = vmatprep.subr.mxu0 0.0
    %174 = vmatpush1.xpose.msra.mxu0 0.0
    %175 = vmatprep.subr.mxu0 0.0
    %176 = vmatpush1.xpose.msra.mxu0 0.0
    %177 = vmatprep.subr.mxu0 0.0
    %178 = vmatpush1.xpose.msra.mxu0 0.0
    %179 = vmatprep.mubr.f32.mxu0 0.0
    %v180 = vand.u32 %v20, 4294901760
    %181 = vmatmul.mubr.f32.gmra.mrb[0].mxu0 %v180
    %v182 = vpop.f32.mrb[0].mxu0
    %v183 = vadd.f32 %v102, %v182
    %v184 = vpop.f32.mrb[0].mxu0
    %185 = vdwg.mxu0
    %186 = vmatprep.subr.mxu0 0.0
    %v187 = vand.u32 %v23, 4294901760
    %v188 = vsub.f32 %v23, %v187
    %189 = vmatpush1.xpose.msra.mxu0 %v188
    %190 = vmatprep.subr.mxu0 0.0
    %v191 = vand.u32 %v26, 4294901760
    %v192 = vsub.f32 %v26, %v191
    %193 = vmatpush1.xpose.msra.mxu0 %v192
    %194 = vmatprep.subr.mxu0 0.0
    %195 = vmatpush1.xpose.msra.mxu0 0.0
    %196 = vmatprep.subr.mxu0 0.0
    %197 = vmatpush1.xpose.msra.mxu0 0.0
    %198 = vmatprep.subr.mxu0 0.0
    %199 = vmatpush1.xpose.msra.mxu0 0.0
    %200 = vmatprep.subr.mxu0 0.0
    %201 = vmatpush1.xpose.msra.mxu0 0.0
    %202 = vmatprep.subr.mxu0 0.0
    %203 = vmatpush1.xpose.msra.mxu0 0.0
    %204 = vmatprep.subr.mxu0 0.0
    %205 = vmatpush1.xpose.msra.mxu0 0.0
    %206 = vmatprep.subr.mxu0 0.0
    %207 = vmatpush1.xpose.msra.mxu0 0.0
    %208 = vmatprep.subr.mxu0 0.0
    %209 = vmatpush1.xpose.msra.mxu0 0.0
    %210 = vmatprep.subr.mxu0 0.0
    %211 = vmatpush1.xpose.msra.mxu0 0.0
    %212 = vmatprep.subr.mxu0 0.0
    %213 = vmatpush1.xpose.msra.mxu0 0.0
    %214 = vmatprep.subr.mxu0 0.0
    %215 = vmatpush1.xpose.msra.mxu0 0.0
    %216 = vmatprep.subr.mxu0 0.0
    %217 = vmatpush1.xpose.msra.mxu0 0.0
    %218 = vmatprep.subr.mxu0 0.0
    %219 = vmatpush1.xpose.msra.mxu0 0.0
    %220 = vmatprep.subr.mxu0 0.0
    %221 = vmatpush1.xpose.msra.mxu0 0.0
    %222 = vmatprep.subr.mxu0 0.0
    %223 = vmatpush1.xpose.msra.mxu0 0.0
    %224 = vmatprep.subr.mxu0 0.0
    %225 = vmatpush1.xpose.msra.mxu0 0.0
    %226 = vmatprep.subr.mxu0 0.0
    %227 = vmatpush1.xpose.msra.mxu0 0.0
    %228 = vmatprep.subr.mxu0 0.0
    %229 = vmatpush1.xpose.msra.mxu0 0.0
    %230 = vmatprep.subr.mxu0 0.0
    %231 = vmatpush1.xpose.msra.mxu0 0.0
    %232 = vmatprep.subr.mxu0 0.0
    %233 = vmatpush1.xpose.msra.mxu0 0.0
    %234 = vmatprep.subr.mxu0 0.0
    %235 = vmatpush1.xpose.msra.mxu0 0.0
    %236 = vmatprep.subr.mxu0 0.0
    %237 = vmatpush1.xpose.msra.mxu0 0.0
    %238 = vmatprep.subr.mxu0 0.0
    %239 = vmatpush1.xpose.msra.mxu0 0.0
    %240 = vmatprep.subr.mxu0 0.0
    %241 = vmatpush1.xpose.msra.mxu0 0.0
    %242 = vmatprep.subr.mxu0 0.0
    %243 = vmatpush1.xpose.msra.mxu0 0.0
    %244 = vmatprep.subr.mxu0 0.0
    %245 = vmatpush1.xpose.msra.mxu0 0.0
    %246 = vmatprep.subr.mxu0 0.0
    %247 = vmatpush1.xpose.msra.mxu0 0.0
    %248 = vmatprep.subr.mxu0 0.0
    %249 = vmatpush1.xpose.msra.mxu0 0.0
    %250 = vmatprep.subr.mxu0 0.0
    %251 = vmatpush1.xpose.msra.mxu0 0.0
    %252 = vmatprep.subr.mxu0 0.0
    %253 = vmatpush1.xpose.msra.mxu0 0.0
    %254 = vmatprep.mubr.f32.mxu0 0.0
    %v255 = vand.u32 %v20, 4294901760
    %v256 = vsub.f32 %v20, %v255
    %257 = vmatmul.mubr.f32.gmra.mrb[0].mxu0 %v256
    %v258 = vpop.f32.mrb[0].mxu0
    %v259 = vadd.f32 %v183, %v258
    %v260 = vpop.f32.mrb[0].mxu0
    %261 = vdwg.mxu0
    %262 = vmatprep.subr.mxu0 0.0
    %v263 = vand.u32 %v23, 4294901760
    %264 = vmatpush1.xpose.msra.mxu0 %v263
    %265 = vmatprep.subr.mxu0 0.0
    %v266 = vand.u32 %v26, 4294901760
    %267 = vmatpush1.xpose.msra.mxu0 %v266
    %268 = vmatprep.subr.mxu0 0.0
    %269 = vmatpush1.xpose.msra.mxu0 0.0
    %270 = vmatprep.subr.mxu0 0.0
    %271 = vmatpush1.xpose.msra.mxu0 0.0
    %272 = vmatprep.subr.mxu0 0.0
    %273 = vmatpush1.xpose.msra.mxu0 0.0
    %274 = vmatprep.subr.mxu0 0.0
    %275 = vmatpush1.xpose.msra.mxu0 0.0
    %276 = vmatprep.subr.mxu0 0.0
    %277 = vmatpush1.xpose.msra.mxu0 0.0
    %278 = vmatprep.subr.mxu0 0.0
    %279 = vmatpush1.xpose.msra.mxu0 0.0
    %280 = vmatprep.subr.mxu0 0.0
    %281 = vmatpush1.xpose.msra.mxu0 0.0
    %282 = vmatprep.subr.mxu0 0.0
    %283 = vmatpush1.xpose.msra.mxu0 0.0
    %284 = vmatprep.subr.mxu0 0.0
    %285 = vmatpush1.xpose.msra.mxu0 0.0
    %286 = vmatprep.subr.mxu0 0.0
    %287 = vmatpush1.xpose.msra.mxu0 0.0
    %288 = vmatprep.subr.mxu0 0.0
    %289 = vmatpush1.xpose.msra.mxu0 0.0
    %290 = vmatprep.subr.mxu0 0.0
    %291 = vmatpush1.xpose.msra.mxu0 0.0
    %292 = vmatprep.subr.mxu0 0.0
    %293 = vmatpush1.xpose.msra.mxu0 0.0
    %294 = vmatprep.subr.mxu0 0.0
    %295 = vmatpush1.xpose.msra.mxu0 0.0
    %296 = vmatprep.subr.mxu0 0.0
    %297 = vmatpush1.xpose.msra.mxu0 0.0
    %298 = vmatprep.subr.mxu0 0.0
    %299 = vmatpush1.xpose.msra.mxu0 0.0
    %300 = vmatprep.subr.mxu0 0.0
    %301 = vmatpush1.xpose.msra.mxu0 0.0
    %302 = vmatprep.subr.mxu0 0.0
    %303 = vmatpush1.xpose.msra.mxu0 0.0
    %304 = vmatprep.subr.mxu0 0.0
    %305 = vmatpush1.xpose.msra.mxu0 0.0
    %306 = vmatprep.subr.mxu0 0.0
    %307 = vmatpush1.xpose.msra.mxu0 0.0
    %308 = vmatprep.subr.mxu0 0.0
    %309 = vmatpush1.xpose.msra.mxu0 0.0
    %310 = vmatprep.subr.mxu0 0.0
    %311 = vmatpush1.xpose.msra.mxu0 0.0
    %312 = vmatprep.subr.mxu0 0.0
    %313 = vmatpush1.xpose.msra.mxu0 0.0
    %314 = vmatprep.subr.mxu0 0.0
    %315 = vmatpush1.xpose.msra.mxu0 0.0
    %316 = vmatprep.subr.mxu0 0.0
    %317 = vmatpush1.xpose.msra.mxu0 0.0
    %318 = vmatprep.subr.mxu0 0.0
    %319 = vmatpush1.xpose.msra.mxu0 0.0
    %320 = vmatprep.subr.mxu0 0.0
    %321 = vmatpush1.xpose.msra.mxu0 0.0
    %322 = vmatprep.subr.mxu0 0.0
    %323 = vmatpush1.xpose.msra.mxu0 0.0
    %324 = vmatprep.subr.mxu0 0.0
    %325 = vmatpush1.xpose.msra.mxu0 0.0
    %326 = vmatprep.subr.mxu0 0.0
    %327 = vmatpush1.xpose.msra.mxu0 0.0
    %328 = vmatprep.mubr.f32.mxu0 0.0
    %v329 = vand.u32 %v20, 4294901760
    %v330 = vsub.f32 %v20, %v329
    %v331 = vand.u32 %v330, 4294901760
    %332 = vmatmul.mubr.f32.gmra.mrb[0].mxu0 %v331
    %v333 = vpop.f32.mrb[0].mxu0
    %v334 = vadd.f32 %v259, %v333
    %v335 = vpop.f32.mrb[0].mxu0
    %336 = vdwg.mxu0
    %337 = vmatprep.subr.mxu0 0.0
    %v338 = vand.u32 %v23, 4294901760
    %v339 = vsub.f32 %v23, %v338
    %v340 = vand.u32 %v339, 4294901760
    %341 = vmatpush1.xpose.msra.mxu0 %v340
    %342 = vmatprep.subr.mxu0 0.0
    %v343 = vand.u32 %v26, 4294901760
    %v344 = vsub.f32 %v26, %v343
    %v345 = vand.u32 %v344, 4294901760
    %346 = vmatpush1.xpose.msra.mxu0 %v345
    %347 = vmatprep.subr.mxu0 0.0
    %348 = vmatpush1.xpose.msra.mxu0 0.0
    %349 = vmatprep.subr.mxu0 0.0
    %350 = vmatpush1.xpose.msra.mxu0 0.0
    %351 = vmatprep.subr.mxu0 0.0
    %352 = vmatpush1.xpose.msra.mxu0 0.0
    %353 = vmatprep.subr.mxu0 0.0
    %354 = vmatpush1.xpose.msra.mxu0 0.0
    %355 = vmatprep.subr.mxu0 0.0
    %356 = vmatpush1.xpose.msra.mxu0 0.0
    %357 = vmatprep.subr.mxu0 0.0
    %358 = vmatpush1.xpose.msra.mxu0 0.0
    %359 = vmatprep.subr.mxu0 0.0
    %360 = vmatpush1.xpose.msra.mxu0 0.0
    %361 = vmatprep.subr.mxu0 0.0
    %362 = vmatpush1.xpose.msra.mxu0 0.0
    %363 = vmatprep.subr.mxu0 0.0
    %364 = vmatpush1.xpose.msra.mxu0 0.0
    %365 = vmatprep.subr.mxu0 0.0
    %366 = vmatpush1.xpose.msra.mxu0 0.0
    %367 = vmatprep.subr.mxu0 0.0
    %368 = vmatpush1.xpose.msra.mxu0 0.0
    %369 = vmatprep.subr.mxu0 0.0
    %370 = vmatpush1.xpose.msra.mxu0 0.0
    %371 = vmatprep.subr.mxu0 0.0
    %372 = vmatpush1.xpose.msra.mxu0 0.0
    %373 = vmatprep.subr.mxu0 0.0
    %374 = vmatpush1.xpose.msra.mxu0 0.0
    %375 = vmatprep.subr.mxu0 0.0
    %376 = vmatpush1.xpose.msra.mxu0 0.0
    %377 = vmatprep.subr.mxu0 0.0
    %378 = vmatpush1.xpose.msra.mxu0 0.0
    %379 = vmatprep.subr.mxu0 0.0
    %380 = vmatpush1.xpose.msra.mxu0 0.0
    %381 = vmatprep.subr.mxu0 0.0
    %382 = vmatpush1.xpose.msra.mxu0 0.0
    %383 = vmatprep.subr.mxu0 0.0
    %384 = vmatpush1.xpose.msra.mxu0 0.0
    %385 = vmatprep.subr.mxu0 0.0
    %386 = vmatpush1.xpose.msra.mxu0 0.0
    %387 = vmatprep.subr.mxu0 0.0
    %388 = vmatpush1.xpose.msra.mxu0 0.0
    %389 = vmatprep.subr.mxu0 0.0
    %390 = vmatpush1.xpose.msra.mxu0 0.0
    %391 = vmatprep.subr.mxu0 0.0
    %392 = vmatpush1.xpose.msra.mxu0 0.0
    %393 = vmatprep.subr.mxu0 0.0
    %394 = vmatpush1.xpose.msra.mxu0 0.0
    %395 = vmatprep.subr.mxu0 0.0
    %396 = vmatpush1.xpose.msra.mxu0 0.0
    %397 = vmatprep.subr.mxu0 0.0
    %398 = vmatpush1.xpose.msra.mxu0 0.0
    %399 = vmatprep.subr.mxu0 0.0
    %400 = vmatpush1.xpose.msra.mxu0 0.0
    %401 = vmatprep.subr.mxu0 0.0
    %402 = vmatpush1.xpose.msra.mxu0 0.0
    %403 = vmatprep.subr.mxu0 0.0
    %404 = vmatpush1.xpose.msra.mxu0 0.0
    %405 = vmatprep.subr.mxu0 0.0
    %406 = vmatpush1.xpose.msra.mxu0 0.0
    %407 = vmatprep.mubr.f32.mxu0 0.0
    %v408 = vand.u32 %v20, 4294901760
    %409 = vmatmul.mubr.f32.gmra.mrb[0].mxu0 %v408
    %v410 = vpop.f32.mrb[0].mxu0
    %v411 = vadd.f32 %v334, %v410
    %v412 = vpop.f32.mrb[0].mxu0
    %413 = vdwg.mxu0
    %414 = vmatprep.subr.mxu0 0.0
    %v415 = vand.u32 %v23, 4294901760
    %416 = vmatpush1.xpose.msra.mxu0 %v415
    %417 = vmatprep.subr.mxu0 0.0
    %v418 = vand.u32 %v26, 4294901760
    %419 = vmatpush1.xpose.msra.mxu0 %v418
    %420 = vmatprep.subr.mxu0 0.0
    %421 = vmatpush1.xpose.msra.mxu0 0.0
    %422 = vmatprep.subr.mxu0 0.0
    %423 = vmatpush1.xpose.msra.mxu0 0.0
    %424 = vmatprep.subr.mxu0 0.0
    %425 = vmatpush1.xpose.msra.mxu0 0.0
    %426 = vmatprep.subr.mxu0 0.0
    %427 = vmatpush1.xpose.msra.mxu0 0.0
    %428 = vmatprep.subr.mxu0 0.0
    %429 = vmatpush1.xpose.msra.mxu0 0.0
    %430 = vmatprep.subr.mxu0 0.0
    %431 = vmatpush1.xpose.msra.mxu0 0.0
    %432 = vmatprep.subr.mxu0 0.0
    %433 = vmatpush1.xpose.msra.mxu0 0.0
    %434 = vmatprep.subr.mxu0 0.0
    %435 = vmatpush1.xpose.msra.mxu0 0.0
    %436 = vmatprep.subr.mxu0 0.0
    %437 = vmatpush1.xpose.msra.mxu0 0.0
    %438 = vmatprep.subr.mxu0 0.0
    %439 = vmatpush1.xpose.msra.mxu0 0.0
    %440 = vmatprep.subr.mxu0 0.0
    %441 = vmatpush1.xpose.msra.mxu0 0.0
    %442 = vmatprep.subr.mxu0 0.0
    %443 = vmatpush1.xpose.msra.mxu0 0.0
    %444 = vmatprep.subr.mxu0 0.0
    %445 = vmatpush1.xpose.msra.mxu0 0.0
    %446 = vmatprep.subr.mxu0 0.0
    %447 = vmatpush1.xpose.msra.mxu0 0.0
    %448 = vmatprep.subr.mxu0 0.0
    %449 = vmatpush1.xpose.msra.mxu0 0.0
    %450 = vmatprep.subr.mxu0 0.0
    %451 = vmatpush1.xpose.msra.mxu0 0.0
    %452 = vmatprep.subr.mxu0 0.0
    %453 = vmatpush1.xpose.msra.mxu0 0.0
    %454 = vmatprep.subr.mxu0 0.0
    %455 = vmatpush1.xpose.msra.mxu0 0.0
    %456 = vmatprep.subr.mxu0 0.0
    %457 = vmatpush1.xpose.msra.mxu0 0.0
    %458 = vmatprep.subr.mxu0 0.0
    %459 = vmatpush1.xpose.msra.mxu0 0.0
    %460 = vmatprep.subr.mxu0 0.0
    %461 = vmatpush1.xpose.msra.mxu0 0.0
    %462 = vmatprep.subr.mxu0 0.0
    %463 = vmatpush1.xpose.msra.mxu0 0.0
    %464 = vmatprep.subr.mxu0 0.0
    %465 = vmatpush1.xpose.msra.mxu0 0.0
    %466 = vmatprep.subr.mxu0 0.0
    %467 = vmatpush1.xpose.msra.mxu0 0.0
    %468 = vmatprep.subr.mxu0 0.0
    %469 = vmatpush1.xpose.msra.mxu0 0.0
    %470 = vmatprep.subr.mxu0 0.0
    %471 = vmatpush1.xpose.msra.mxu0 0.0
    %472 = vmatprep.subr.mxu0 0.0
    %473 = vmatpush1.xpose.msra.mxu0 0.0
    %474 = vmatprep.subr.mxu0 0.0
    %475 = vmatpush1.xpose.msra.mxu0 0.0
    %476 = vmatprep.subr.mxu0 0.0
    %477 = vmatpush1.xpose.msra.mxu0 0.0
    %478 = vmatprep.subr.mxu0 0.0
    %479 = vmatpush1.xpose.msra.mxu0 0.0
    %480 = vmatprep.mubr.f32.mxu0 0.0
    %v481 = vand.u32 %v20, 4294901760
    %482 = vmatmul.mubr.f32.gmra.mrb[0].mxu0 %v481
    %v483 = vpop.f32.mrb[0].mxu0
    %v484 = vadd.f32 %v411, %v483
    %v485 = vpop.f32.mrb[0].mxu0
    %486 = vdwg.mxu0
    %v487 = vld [vmem:[%s2] sm:$0x1]
    %v488 = vmul.f32 %v484, %v487
    %v489 = vtanh.pop %v488
    %vm490 = vcmask 122880
    %491 = vst.msk [vmem:[#allocation2] sm:$0x1] %vm490, %v489
    // Predicated region
    $region14: #{tpu_custom_call.1} parent=1 // pred_check
      _
    $region15: #{tpu_custom_call.1} parent=1 // pred_check_branch
      %493 = sbr.rel (0) target = $region17
    $region16: #{tpu_custom_call.1} parent=1 // pred_region
      %s495 = ssub.s32 16, 16
      %496 = vsyncadd [#allocation3], %s495
      %s498 = sshll.u32 [#allocation2], 4
      %s499 = int_to_ptr.vmem [resolvable:$true] %s498
      %501 = dma.vmem_to_hbm [thread:$0]  %s499, 16, %s3, [#allocation3]
    $region17: #{tpu_custom_call.1} parent=1 // pred_fallthru
      _
    // Predicated region
    $region18: #{tpu_custom_call.1} parent=1 // pred_check
      _
    $region19: #{tpu_custom_call.1} parent=1 // pred_check_branch
      %503 = sbr.rel (0) target = $region21
    $region20: #{tpu_custom_call.1} parent=1 // pred_region
      %504 = dma.done [#allocation3], 16
    $region21: #{tpu_custom_call.1} parent=1 // pred_fallthru
      _
    %505 = vsyncpa [#allocation3], 1

</llo_original>
